<compile_context>
chip_gen: v6e
topology: v6e:2x2x1
jax: 0.10.0
libtpu: 0.0.40
codegen_flags: <defaults>
</compile_context>

<pallas_src>
import numpy as np
import jax
import jax.numpy as jnp
from jax.experimental import pallas as pl
from jax.experimental.pallas import tpu as pltpu

B_BITS = 4      # quantization bit-width "B" of QuantizationLayer(B)


def _quant_bits_kernel(x_ref, e_ref, o_ref):
    # x_ref: (tb, tn) f32, e_ref: (chunk, chunk*B) bf16, o_ref: (tb, tn*B) out_dtype
    chunk = e_ref.shape[0]
    out_w = chunk * B_BITS
    scale = jnp.float32(2.0 ** B_BITS)
    n_chunks = x_ref.shape[-1] // chunk

    # Static unroll; each body is self-contained (load E slab, dot, bit-extract,
    # full-width store) so nothing large stays live across bodies.
    for c in range(n_chunks):
        xc = x_ref[:, c * chunk:(c + 1) * chunk]                      # (tb, chunk) f32
        q = jnp.round(xc * scale - 0.5)                               # half-to-even == torch.round
        q8 = (q.astype(jnp.int32) & 0xFF).astype(jnp.bfloat16)        # uint8 wrap; 0..255 exact in bf16
        # (tb,chunk) @ (chunk,chunk*B): rep[:, n*B+k] == q8[:, n] * 2^(k-(B-1)), exact in f32 accum.
        rep = jnp.dot(q8, e_ref[...], preferred_element_type=jnp.float32)
        bits = (rep.astype(jnp.int32) & 1).astype(o_ref.dtype)        # floor + &1 -> bit (B-1-k), MSB first
        o_ref[:, c * out_w:(c + 1) * out_w] = bits                    # lane-dense unmasked store


def _expansion_matrix(chunk: int) -> jax.Array:
    # E[n, n*B + k] = 2^(k - (B-1)), zeros elsewhere.  Shape (chunk, chunk*B).
    scales = 2.0 ** np.arange(-(B_BITS - 1), 1, dtype=np.float64)     # [1/8, 1/4, 1/2, 1]
    e = np.kron(np.eye(chunk, dtype=np.float64), scales[None, :])
    return jnp.asarray(e, dtype=jnp.bfloat16)                         # powers of two: exact in bf16


def _pick_tile(dim: int, target: int, align: int) -> int:
    """Largest multiple of `align` <= target that divides `dim`; else the full dim."""
    if dim <= target:
        return dim
    t = (target // align) * align
    while t >= align:
        if dim % t == 0:
            return t
        t -= align
    return dim


def _vmem_capacity_bytes() -> int:
    """Physical per-core VMEM; conservative (v7x-sized) fallback if query fails."""
    try:
        info = pltpu.get_tpu_info()
        for attr in ("vmem_capacity_bytes", "vmem_bytes", "vmem_size_bytes"):
            v = getattr(info, attr, None)
            if v:
                return int(v)
    except Exception:
        pass
    return 64 * 1024 * 1024


def quantization_layer(x: jax.Array, *, tn: int | None = None, tb: int | None = None,
                       out_dtype=jnp.float32) -> jax.Array:
    """x: (batch, N) float32 -> (batch, N*B_BITS) of {0., 1.} bits (MSB first per element).

    out_dtype defaults to float32 (matches the PyTorch module); pass jnp.bfloat16 or
    jnp.int8 to shrink the dominant HBM write stream if the consumer tolerates it.
    """
    bsz, n = x.shape
    assert n % 128 == 0, "feature dim must be a multiple of 128"

    # Generation-aware tile targets / VMEM budget (v5e/v6e: 128 MiB; v7x: 64 MiB).
    big_vmem = _vmem_capacity_bytes() >= 96 * 1024 * 1024
    vmem_limit = (64 if big_vmem else 48) * 1024 * 1024

    chunk = 256 if n % 256 == 0 else 128          # MXU contraction width
    if tn is None:
        tn = _pick_tile(n, 2048 if big_vmem else 1024, chunk)   # input lanes (output = 4x)
    if tb is None:
        tb = _pick_tile(bsz, 512, 8)                            # batch rows per block
    if tn % 256 != 0:
        chunk = 128                                             # fall back for 128-lane tiles
    assert n % tn == 0 and tn % chunk == 0
    assert bsz % tb == 0

    e = _expansion_matrix(chunk)
    out_itemsize = np.dtype(out_dtype).itemsize
    cost = pl.CostEstimate(
        flops=2 * bsz * n * chunk * B_BITS,
        transcendentals=0,
        bytes_accessed=bsz * n * 4 + bsz * n * B_BITS * out_itemsize,
    )

    return pl.pallas_call(
        _quant_bits_kernel,
        out_shape=jax.ShapeDtypeStruct((bsz, n * B_BITS), out_dtype),
        grid_spec=pl.GridSpec(
            grid=(bsz // tb, n // tn),
            in_specs=[
                pl.BlockSpec((tb, tn), lambda i, j: (i, j)),
                pl.BlockSpec((chunk, chunk * B_BITS), lambda i, j: (0, 0)),  # constant block
            ],
            out_specs=pl.BlockSpec((tb, tn * B_BITS), lambda i, j: (i, j)),
        ),
        compiler_params=pltpu.CompilerParams(
            dimension_semantics=("parallel", "parallel"),
            vmem_limit_bytes=vmem_limit,
        ),
        cost_estimate=cost,
    )(x, e)


def _reference_numpy(x: np.ndarray, B: int) -> np.ndarray:
    # float32 math to match the kernel exactly (x*2^B is exact; only the -0.5 rounds).
    x32 = x.astype(np.float32)
    q = np.round(x32 * np.float32(2 ** B) - np.float32(0.5)).astype(np.int64) & 0xFF
    shifts = np.arange(B - 1, -1, -1)
    bits = ((q[..., None] >> shifts) & 1).astype(np.float32)
    return bits.reshape(x.shape[0], -1)


if __name__ == "__main__":
    key = jax.random.PRNGKey(0)
    batch, n_feat = 2, 256
    # typical input to this layer is a sigmoid output in [0, 1)
    x = jax.random.uniform(key, (batch, n_feat), dtype=jnp.float32)

    out = jax.block_until_ready(quantization_layer(x))
    ref = _reference_numpy(np.asarray(x), B_BITS)
    assert out.shape == (batch, n_feat * B_BITS), out.shape
    assert out.dtype == jnp.float32
    np.testing.assert_array_equal(np.asarray(out), ref)

    # multi-block, multi-chunk path: grid (2, 2), chunk=256, 2 chunks per block
    x2 = jax.random.uniform(jax.random.PRNGKey(1), (16, 1024), dtype=jnp.float32)
    ref2 = _reference_numpy(np.asarray(x2), B_BITS)
    out2 = jax.block_until_ready(quantization_layer(x2, tn=512, tb=8))
    np.testing.assert_array_equal(np.asarray(out2), ref2)

    # 128-lane chunk fallback path (tn not a multiple of 256)
    out3 = jax.block_until_ready(quantization_layer(x, tn=128, tb=2))
    np.testing.assert_array_equal(np.asarray(out3), ref)

    # optional reduced-width output stream (bit values {0,1} are exact in bf16)
    out4 = jax.block_until_ready(quantization_layer(x2, out_dtype=jnp.bfloat16))
    np.testing.assert_array_equal(np.asarray(out4, dtype=np.float32), ref2)

    print("KERNEL_OK")
</pallas_src>

<mosaic_0001>
module attributes {stable_mosaic.version = 11 : i64} {
  func.func @_quant_bits_kernel(%arg0: i32, %arg1: i32, %arg2: memref<2x256xf32, #tpu.memory_space<vmem>>, %arg3: memref<256x1024xbf16, #tpu.memory_space<vmem>>, %arg4: memref<2x1024xf32, #tpu.memory_space<vmem>>) attributes {dimension_semantics = [#tpu.dimension_semantics<parallel>, #tpu.dimension_semantics<parallel>], iteration_bounds = array<i64: 1, 1>, scalar_prefetch = 0 : i64, scratch_operands = 0 : i64, tpu.core_type = #tpu.core_type<tc>, window_params = [{transform_indices = @transform_0, window_bounds = array<i64: 2, 256>}, {pipeline_mode = #tpu.pipeline_mode<synchronous>, transform_indices = @transform_1, window_bounds = array<i64: 256, 1024>}, {transform_indices = @transform_2, window_bounds = array<i64: 2, 1024>}]} {
    %c0 = arith.constant 0 : index
    %c0_0 = arith.constant 0 : index
    %0 = vector.load %arg2[%c0, %c0_0] : memref<2x256xf32, #tpu.memory_space<vmem>>, vector<2x256xf32>
    %cst = arith.constant 1.600000e+01 : f32
    %1 = vector.broadcast %cst : f32 to vector<2x256xf32>
    %2 = arith.mulf %0, %1 : vector<2x256xf32>
    %cst_1 = arith.constant 5.000000e-01 : f32
    %3 = vector.broadcast %cst_1 : f32 to vector<2x256xf32>
    %4 = arith.subf %2, %3 : vector<2x256xf32>
    %5 = math.roundeven %4 : vector<2x256xf32>
    %6 = arith.fptosi %5 : vector<2x256xf32> to vector<2x256xi32>
    %c255_i32 = arith.constant 255 : i32
    %7 = vector.broadcast %c255_i32 : i32 to vector<2x256xi32>
    %8 = arith.andi %6, %7 : vector<2x256xi32>
    %9 = arith.sitofp %8 : vector<2x256xi32> to vector<2x256xbf16>
    %c0_2 = arith.constant 0 : index
    %c0_3 = arith.constant 0 : index
    %10 = vector.load %arg3[%c0_2, %c0_3] : memref<256x1024xbf16, #tpu.memory_space<vmem>>, vector<256x1024xbf16>
    %cst_4 = arith.constant dense<0.000000e+00> : vector<2x1024xf32>
    %11 = tpu.matmul %9, %10, %cst_4 {dimension_numbers = #tpu.dot_dimension_numbers<[1], [0], [0], [1], [0, 0, 1, 1], [], []>} : vector<2x256xbf16>, vector<256x1024xbf16>, vector<2x1024xf32> -> vector<2x1024xf32>
    %12 = arith.fptosi %11 : vector<2x1024xf32> to vector<2x1024xi32>
    %c1_i32 = arith.constant 1 : i32
    %13 = vector.broadcast %c1_i32 : i32 to vector<2x1024xi32>
    %14 = arith.andi %12, %13 : vector<2x1024xi32>
    %15 = arith.sitofp %14 : vector<2x1024xi32> to vector<2x1024xf32>
    %c0_5 = arith.constant 0 : index
    %c0_6 = arith.constant 0 : index
    %16 = vector.load %arg4[%c0_5, %c0_6] : memref<2x1024xf32, #tpu.memory_space<vmem>>, vector<2x1024xf32>
    tpu.vector_store %arg4[%c0_5, %c0_6], %15 {strides = array<i32>} : memref<2x1024xf32, #tpu.memory_space<vmem>>, vector<2x1024xf32>,
    return
  }
  func.func @transform_0(%arg0: i32, %arg1: i32) -> (i32, i32) {
    %c0_i32 = arith.constant 0 : i32
    return %arg0, %arg1 : i32, i32
  }
  func.func @transform_1(%arg0: i32, %arg1: i32) -> (i32, i32) {
    %c0_i32 = arith.constant 0 : i32
    %c0_i32_0 = arith.constant 0 : i32
    %c0_i32_1 = arith.constant 0 : i32
    return %c0_i32, %c0_i32_0 : i32, i32
  }
  func.func @transform_2(%arg0: i32, %arg1: i32) -> (i32, i32) {
    %c0_i32 = arith.constant 0 : i32
    return %arg0, %arg1 : i32, i32
  }
}

</mosaic_0001>

<llo_original>
// kernel: tpu_custom_call.1
$region0: #{tpu_custom_call.1}
  #allocation0 [shape = 'u32[]', space=smem, size = 0x4, offset = 0x4, fixed_abs, tag = 'smem constant byte address 0x4 - core index']
  #allocation1 [shape = 'u32[144,128]{1,0:T(1,128)}', space=vmem, size = 0x12000, scoped, tag = 'internal scratch']
  %s0 = inlined_call_operand.hbm [shape: f32[2,256], index: 0, kind: input, shape index: {}]
  %s1 = inlined_call_operand.hbm [shape: bf16[256,1024], index: 1, kind: input, shape index: {}]
  %s2 = inlined_call_operand.hbm [shape: f32[2,1024], index: 2, kind: output, shape index: {}]
  %s3 = sld [smem:[#allocation0]]
  $region26: #{tpu_custom_call.1} parent=0
    _
  %s5 = ssub.s32 1, %s3
  %s6 = scalar_select 0, %s5, %s3
  $region1: #{tpu_custom_call.1} parent=0
    #allocation2 [shape = 'u8[2048]{0}', space=vmem, size = 0x800, scoped, tag = 'input window, operand 0, single buffered']
    #allocation3 [shape = 's32[1]{0}', space=sflag, size = 0x4, scoped, tag = 'scoped memory for tpu_custom_call.1']
    #allocation4 [shape = 's32[1]{0}', space=sflag, size = 0x4, scoped, tag = 'scoped memory for tpu_custom_call.1']
    #allocation5 [shape = 'u8[524288]{0}', space=vmem, size = 0x80000, scoped, tag = 'input window, operand 1, single buffered']
    #allocation6 [shape = 's32[1]{0}', space=sflag, size = 0x4, scoped, tag = 'scoped memory for tpu_custom_call.1']
    #allocation7 [shape = 'u8[8192]{0}', space=vmem, size = 0x2000, scoped, tag = 'output window, operand 0, single buffered']
    %7 = vsyncpa [#allocation3], 0
    %8 = vsyncpa [#allocation6], 0
    %9 = vsyncpa [#allocation4], 0
    // Predicated region
    $region2: #{tpu_custom_call.1} parent=1 // pred_check
      _
    $region3: #{tpu_custom_call.1} parent=1 // pred_check_branch
      %11 = sbr.rel (0) target = $region5
    $region4: #{tpu_custom_call.1} parent=1 // pred_region
      %s13 = ssub.s32 64, 64
      %14 = vsyncadd [#allocation3], %s13
      %s16 = sshll.u32 [#allocation2], 4
      %s17 = int_to_ptr.vmem [resolvable:$true] %s16
      %19 = dma.hbm_to_vmem [thread:$0]  %s0, 64, %s17, [#allocation3]
    $region5: #{tpu_custom_call.1} parent=1 // pred_fallthru
      _
    // Predicated region
    $region6: #{tpu_custom_call.1} parent=1 // pred_check
      _
    $region7: #{tpu_custom_call.1} parent=1 // pred_check_branch
      %21 = sbr.rel (0) target = $region9
    $region8: #{tpu_custom_call.1} parent=1 // pred_region
      %s23 = ssub.s32 16384, 16384
      %24 = vsyncadd [#allocation6], %s23
      %s25 = sshll.u32 [#allocation5], 4
      %s26 = int_to_ptr.vmem [resolvable:$true] %s25
      %31 = dma.hbm_to_vmem [thread:$0]  %s1, 16384, %s26, [#allocation6], 512, 512, 32
    $region9: #{tpu_custom_call.1} parent=1 // pred_fallthru
      _
    // Predicated region
    $region10: #{tpu_custom_call.1} parent=1 // pred_check
      _
    $region11: #{tpu_custom_call.1} parent=1 // pred_check_branch
      %33 = sbr.rel (0) target = $region13
    $region12: #{tpu_custom_call.1} parent=1 // pred_region
      %34 = dma.done [#allocation3], 64
    $region13: #{tpu_custom_call.1} parent=1 // pred_fallthru
      _
    // Predicated region
    $region14: #{tpu_custom_call.1} parent=1 // pred_check
      _
    $region15: #{tpu_custom_call.1} parent=1 // pred_check_branch
      %36 = sbr.rel (0) target = $region17
    $region16: #{tpu_custom_call.1} parent=1 // pred_region
      %37 = dma.done [#allocation6], 16384
    $region17: #{tpu_custom_call.1} parent=1 // pred_fallthru
      _
    %v38 = vld [vmem:[#allocation2] sm:$0xf]
    %v39 = vmul.f32 %v38, 16.0
    %v40 = vsub.f32 %v39, 0.5
    %v41 = vcvt.f32.s32.ties.to.even %v40
    %v42 = vand.u32 %v41, 255
    %v43 = vcvt.s32.f32 %v42
    %v46 = vunpack.c.l.s4 1983009808
    %v47 = vunpack.c.0.s8 %v46
    %v48 = vlaneseq
    %v49 = vshrl.u32 %v48, 7
    %v50 = vsub.s32 %v47, %v49
    %v51 = vrot.slane %v43, %v50
    %v52 = vcombine.high %v51, %v51
    %v55 = vpack.c.bf16 %v51, %v51
    %v56 = vpack.c.bf16 %v52, %v52
    %v57 = vld [vmem:[#allocation5] sm:$0xff]
    %v58 = vld [vmem:[#allocation5 + $0x8] sm:$0xff]
    %v59 = vld [vmem:[#allocation5 + $0x10] sm:$0xff]
    %v60 = vld [vmem:[#allocation5 + $0x18] sm:$0xff]
    %v61 = vld [vmem:[#allocation5 + $0x20] sm:$0xff]
    %v62 = vld [vmem:[#allocation5 + $0x28] sm:$0xff]
    %v63 = vld [vmem:[#allocation5 + $0x30] sm:$0xff]
    %v64 = vld [vmem:[#allocation5 + $0x38] sm:$0xff]
    %v65 = vld [vmem:[#allocation5 + $0x40] sm:$0xff]
    %v66 = vld [vmem:[#allocation5 + $0x48] sm:$0xff]
    %v67 = vld [vmem:[#allocation5 + $0x50] sm:$0xff]
    %v68 = vld [vmem:[#allocation5 + $0x58] sm:$0xff]
    %v69 = vld [vmem:[#allocation5 + $0x60] sm:$0xff]
    %v70 = vld [vmem:[#allocation5 + $0x68] sm:$0xff]
    %v71 = vld [vmem:[#allocation5 + $0x70] sm:$0xff]
    %v72 = vld [vmem:[#allocation5 + $0x78] sm:$0xff]
    %v73 = vld [vmem:[#allocation5 + $0x80] sm:$0xff]
    %v74 = vld [vmem:[#allocation5 + $0x88] sm:$0xff]
    %v75 = vld [vmem:[#allocation5 + $0x90] sm:$0xff]
    %v76 = vld [vmem:[#allocation5 + $0x98] sm:$0xff]
    %v77 = vld [vmem:[#allocation5 + $0xa0] sm:$0xff]
    %v78 = vld [vmem:[#allocation5 + $0xa8] sm:$0xff]
    %v79 = vld [vmem:[#allocation5 + $0xb0] sm:$0xff]
    %v80 = vld [vmem:[#allocation5 + $0xb8] sm:$0xff]
    %v81 = vld [vmem:[#allocation5 + $0xc0] sm:$0xff]
    %v82 = vld [vmem:[#allocation5 + $0xc8] sm:$0xff]
    %v83 = vld [vmem:[#allocation5 + $0xd0] sm:$0xff]
    %v84 = vld [vmem:[#allocation5 + $0xd8] sm:$0xff]
    %v85 = vld [vmem:[#allocation5 + $0xe0] sm:$0xff]
    %v86 = vld [vmem:[#allocation5 + $0xe8] sm:$0xff]
    %v87 = vld [vmem:[#allocation5 + $0xf0] sm:$0xff]
    %v88 = vld [vmem:[#allocation5 + $0xf8] sm:$0xff]
    %v89 = vld [vmem:[#allocation5 + $0x100] sm:$0xff]
    %v90 = vld [vmem:[#allocation5 + $0x108] sm:$0xff]
    %v91 = vld [vmem:[#allocation5 + $0x110] sm:$0xff]
    %v92 = vld [vmem:[#allocation5 + $0x118] sm:$0xff]
    %v93 = vld [vmem:[#allocation5 + $0x120] sm:$0xff]
    %v94 = vld [vmem:[#allocation5 + $0x128] sm:$0xff]
    %v95 = vld [vmem:[#allocation5 + $0x130] sm:$0xff]
    %v96 = vld [vmem:[#allocation5 + $0x138] sm:$0xff]
    %v97 = vld [vmem:[#allocation5 + $0x140] sm:$0xff]
    %v98 = vld [vmem:[#allocation5 + $0x148] sm:$0xff]
    %v99 = vld [vmem:[#allocation5 + $0x150] sm:$0xff]
    %v100 = vld [vmem:[#allocation5 + $0x158] sm:$0xff]
    %v101 = vld [vmem:[#allocation5 + $0x160] sm:$0xff]
    %v102 = vld [vmem:[#allocation5 + $0x168] sm:$0xff]
    %v103 = vld [vmem:[#allocation5 + $0x170] sm:$0xff]
    %v104 = vld [vmem:[#allocation5 + $0x178] sm:$0xff]
    %v105 = vld [vmem:[#allocation5 + $0x180] sm:$0xff]
    %v106 = vld [vmem:[#allocation5 + $0x188] sm:$0xff]
    %v107 = vld [vmem:[#allocation5 + $0x190] sm:$0xff]
    %v108 = vld [vmem:[#allocation5 + $0x198] sm:$0xff]
    %v109 = vld [vmem:[#allocation5 + $0x1a0] sm:$0xff]
    %v110 = vld [vmem:[#allocation5 + $0x1a8] sm:$0xff]
    %v111 = vld [vmem:[#allocation5 + $0x1b0] sm:$0xff]
    %v112 = vld [vmem:[#allocation5 + $0x1b8] sm:$0xff]
    %v113 = vld [vmem:[#allocation5 + $0x1c0] sm:$0xff]
    %v114 = vld [vmem:[#allocation5 + $0x1c8] sm:$0xff]
    %v115 = vld [vmem:[#allocation5 + $0x1d0] sm:$0xff]
    %v116 = vld [vmem:[#allocation5 + $0x1d8] sm:$0xff]
    %v117 = vld [vmem:[#allocation5 + $0x1e0] sm:$0xff]
    %v118 = vld [vmem:[#allocation5 + $0x1e8] sm:$0xff]
    %v119 = vld [vmem:[#allocation5 + $0x1f0] sm:$0xff]
    %v120 = vld [vmem:[#allocation5 + $0x1f8] sm:$0xff]
    %v121 = vld [vmem:[#allocation5 + $0x200] sm:$0xff]
    %v122 = vld [vmem:[#allocation5 + $0x208] sm:$0xff]
    %v123 = vld [vmem:[#allocation5 + $0x210] sm:$0xff]
    %v124 = vld [vmem:[#allocation5 + $0x218] sm:$0xff]
    %v125 = vld [vmem:[#allocation5 + $0x220] sm:$0xff]
    %v126 = vld [vmem:[#allocation5 + $0x228] sm:$0xff]
    %v127 = vld [vmem:[#allocation5 + $0x230] sm:$0xff]
    %v128 = vld [vmem:[#allocation5 + $0x238] sm:$0xff]
    %v129 = vld [vmem:[#allocation5 + $0x240] sm:$0xff]
    %v130 = vld [vmem:[#allocation5 + $0x248] sm:$0xff]
    %v131 = vld [vmem:[#allocation5 + $0x250] sm:$0xff]
    %v132 = vld [vmem:[#allocation5 + $0x258] sm:$0xff]
    %v133 = vld [vmem:[#allocation5 + $0x260] sm:$0xff]
    %v134 = vld [vmem:[#allocation5 + $0x268] sm:$0xff]
    %v135 = vld [vmem:[#allocation5 + $0x270] sm:$0xff]
    %v136 = vld [vmem:[#allocation5 + $0x278] sm:$0xff]
    %v137 = vld [vmem:[#allocation5 + $0x280] sm:$0xff]
    %v138 = vld [vmem:[#allocation5 + $0x288] sm:$0xff]
    %v139 = vld [vmem:[#allocation5 + $0x290] sm:$0xff]
    %v140 = vld [vmem:[#allocation5 + $0x298] sm:$0xff]
    %v141 = vld [vmem:[#allocation5 + $0x2a0] sm:$0xff]
    %v142 = vld [vmem:[#allocation5 + $0x2a8] sm:$0xff]
    %v143 = vld [vmem:[#allocation5 + $0x2b0] sm:$0xff]
    %v144 = vld [vmem:[#allocation5 + $0x2b8] sm:$0xff]
    %v145 = vld [vmem:[#allocation5 + $0x2c0] sm:$0xff]
    %v146 = vld [vmem:[#allocation5 + $0x2c8] sm:$0xff]
    %v147 = vld [vmem:[#allocation5 + $0x2d0] sm:$0xff]
    %v148 = vld [vmem:[#allocation5 + $0x2d8] sm:$0xff]
    %v149 = vld [vmem:[#allocation5 + $0x2e0] sm:$0xff]
    %v150 = vld [vmem:[#allocation5 + $0x2e8] sm:$0xff]
    %v151 = vld [vmem:[#allocation5 + $0x2f0] sm:$0xff]
    %v152 = vld [vmem:[#allocation5 + $0x2f8] sm:$0xff]
    %v153 = vld [vmem:[#allocation5 + $0x300] sm:$0xff]
    %v154 = vld [vmem:[#allocation5 + $0x308] sm:$0xff]
    %v155 = vld [vmem:[#allocation5 + $0x310] sm:$0xff]
    %v156 = vld [vmem:[#allocation5 + $0x318] sm:$0xff]
    %v157 = vld [vmem:[#allocation5 + $0x320] sm:$0xff]
    %v158 = vld [vmem:[#allocation5 + $0x328] sm:$0xff]
    %v159 = vld [vmem:[#allocation5 + $0x330] sm:$0xff]
    %v160 = vld [vmem:[#allocation5 + $0x338] sm:$0xff]
    %v161 = vld [vmem:[#allocation5 + $0x340] sm:$0xff]
    %v162 = vld [vmem:[#allocation5 + $0x348] sm:$0xff]
    %v163 = vld [vmem:[#allocation5 + $0x350] sm:$0xff]
    %v164 = vld [vmem:[#allocation5 + $0x358] sm:$0xff]
    %v165 = vld [vmem:[#allocation5 + $0x360] sm:$0xff]
    %v166 = vld [vmem:[#allocation5 + $0x368] sm:$0xff]
    %v167 = vld [vmem:[#allocation5 + $0x370] sm:$0xff]
    %v168 = vld [vmem:[#allocation5 + $0x378] sm:$0xff]
    %v169 = vld [vmem:[#allocation5 + $0x380] sm:$0xff]
    %v170 = vld [vmem:[#allocation5 + $0x388] sm:$0xff]
    %v171 = vld [vmem:[#allocation5 + $0x390] sm:$0xff]
    %v172 = vld [vmem:[#allocation5 + $0x398] sm:$0xff]
    %v173 = vld [vmem:[#allocation5 + $0x3a0] sm:$0xff]
    %v174 = vld [vmem:[#allocation5 + $0x3a8] sm:$0xff]
    %v175 = vld [vmem:[#allocation5 + $0x3b0] sm:$0xff]
    %v176 = vld [vmem:[#allocation5 + $0x3b8] sm:$0xff]
    %v177 = vld [vmem:[#allocation5 + $0x3c0] sm:$0xff]
    %v178 = vld [vmem:[#allocation5 + $0x3c8] sm:$0xff]
    %v179 = vld [vmem:[#allocation5 + $0x3d0] sm:$0xff]
    %v180 = vld [vmem:[#allocation5 + $0x3d8] sm:$0xff]
    %v181 = vld [vmem:[#allocation5 + $0x3e0] sm:$0xff]
    %v182 = vld [vmem:[#allocation5 + $0x3e8] sm:$0xff]
    %v183 = vld [vmem:[#allocation5 + $0x3f0] sm:$0xff]
    %v184 = vld [vmem:[#allocation5 + $0x3f8] sm:$0xff]
    %v313 = vunpack.c.l.b16 %v57
    %v314 = vunpack.c.h.b16 %v57
    %v315 = vunpack.c.l.b16 %v58
    %v316 = vunpack.c.h.b16 %v58
    %v317 = vunpack.c.l.b16 %v59
    %v318 = vunpack.c.h.b16 %v59
    %v319 = vunpack.c.l.b16 %v60
    %v320 = vunpack.c.h.b16 %v60
    %v321 = vunpack.c.l.b16 %v61
    %v322 = vunpack.c.h.b16 %v61
    %v323 = vunpack.c.l.b16 %v62
    %v324 = vunpack.c.h.b16 %v62
    %v325 = vunpack.c.l.b16 %v63
    %v326 = vunpack.c.h.b16 %v63
    %v327 = vunpack.c.l.b16 %v64
    %v328 = vunpack.c.h.b16 %v64
    %v329 = vunpack.c.l.b16 %v65
    %v330 = vunpack.c.h.b16 %v65
    %v331 = vunpack.c.l.b16 %v66
    %v332 = vunpack.c.h.b16 %v66
    %v333 = vunpack.c.l.b16 %v67
    %v334 = vunpack.c.h.b16 %v67
    %v335 = vunpack.c.l.b16 %v68
    %v336 = vunpack.c.h.b16 %v68
    %v337 = vunpack.c.l.b16 %v69
    %v338 = vunpack.c.h.b16 %v69
    %v339 = vunpack.c.l.b16 %v70
    %v340 = vunpack.c.h.b16 %v70
    %v341 = vunpack.c.l.b16 %v71
    %v342 = vunpack.c.h.b16 %v71
    %v343 = vunpack.c.l.b16 %v72
    %v344 = vunpack.c.h.b16 %v72
    %v345 = vunpack.c.l.b16 %v73
    %v346 = vunpack.c.h.b16 %v73
    %v347 = vunpack.c.l.b16 %v74
    %v348 = vunpack.c.h.b16 %v74
    %v349 = vunpack.c.l.b16 %v75
    %v350 = vunpack.c.h.b16 %v75
    %v351 = vunpack.c.l.b16 %v76
    %v352 = vunpack.c.h.b16 %v76
    %v353 = vunpack.c.l.b16 %v77
    %v354 = vunpack.c.h.b16 %v77
    %v355 = vunpack.c.l.b16 %v78
    %v356 = vunpack.c.h.b16 %v78
    %v357 = vunpack.c.l.b16 %v79
    %v358 = vunpack.c.h.b16 %v79
    %v359 = vunpack.c.l.b16 %v80
    %v360 = vunpack.c.h.b16 %v80
    %v361 = vunpack.c.l.b16 %v81
    %v362 = vunpack.c.h.b16 %v81
    %v363 = vunpack.c.l.b16 %v82
    %v364 = vunpack.c.h.b16 %v82
    %v365 = vunpack.c.l.b16 %v83
    %v366 = vunpack.c.h.b16 %v83
    %v367 = vunpack.c.l.b16 %v84
    %v368 = vunpack.c.h.b16 %v84
    %v369 = vunpack.c.l.b16 %v85
    %v370 = vunpack.c.h.b16 %v85
    %v371 = vunpack.c.l.b16 %v86
    %v372 = vunpack.c.h.b16 %v86
    %v373 = vunpack.c.l.b16 %v87
    %v374 = vunpack.c.h.b16 %v87
    %v375 = vunpack.c.l.b16 %v88
    %v376 = vunpack.c.h.b16 %v88
    %v377 = vunpack.c.l.b16 %v89
    %v378 = vunpack.c.h.b16 %v89
    %v379 = vunpack.c.l.b16 %v90
    %v380 = vunpack.c.h.b16 %v90
    %v381 = vunpack.c.l.b16 %v91
    %v382 = vunpack.c.h.b16 %v91
    %v383 = vunpack.c.l.b16 %v92
    %v384 = vunpack.c.h.b16 %v92
    %v385 = vunpack.c.l.b16 %v93
    %v386 = vunpack.c.h.b16 %v93
    %v387 = vunpack.c.l.b16 %v94
    %v388 = vunpack.c.h.b16 %v94
    %v389 = vunpack.c.l.b16 %v95
    %v390 = vunpack.c.h.b16 %v95
    %v391 = vunpack.c.l.b16 %v96
    %v392 = vunpack.c.h.b16 %v96
    %v393 = vunpack.c.l.b16 %v97
    %v394 = vunpack.c.h.b16 %v97
    %v395 = vunpack.c.l.b16 %v98
    %v396 = vunpack.c.h.b16 %v98
    %v397 = vunpack.c.l.b16 %v99
    %v398 = vunpack.c.h.b16 %v99
    %v399 = vunpack.c.l.b16 %v100
    %v400 = vunpack.c.h.b16 %v100
    %v401 = vunpack.c.l.b16 %v101
    %v402 = vunpack.c.h.b16 %v101
    %v403 = vunpack.c.l.b16 %v102
    %v404 = vunpack.c.h.b16 %v102
    %v405 = vunpack.c.l.b16 %v103
    %v406 = vunpack.c.h.b16 %v103
    %v407 = vunpack.c.l.b16 %v104
    %v408 = vunpack.c.h.b16 %v104
    %v409 = vunpack.c.l.b16 %v105
    %v410 = vunpack.c.h.b16 %v105
    %v411 = vunpack.c.l.b16 %v106
    %v412 = vunpack.c.h.b16 %v106
    %v413 = vunpack.c.l.b16 %v107
    %v414 = vunpack.c.h.b16 %v107
    %v415 = vunpack.c.l.b16 %v108
    %v416 = vunpack.c.h.b16 %v108
    %v417 = vunpack.c.l.b16 %v109
    %v418 = vunpack.c.h.b16 %v109
    %v419 = vunpack.c.l.b16 %v110
    %v420 = vunpack.c.h.b16 %v110
    %v421 = vunpack.c.l.b16 %v111
    %v422 = vunpack.c.h.b16 %v111
    %v423 = vunpack.c.l.b16 %v112
    %v424 = vunpack.c.h.b16 %v112
    %v425 = vunpack.c.l.b16 %v113
    %v426 = vunpack.c.h.b16 %v113
    %v427 = vunpack.c.l.b16 %v114
    %v428 = vunpack.c.h.b16 %v114
    %v429 = vunpack.c.l.b16 %v115
    %v430 = vunpack.c.h.b16 %v115
    %v431 = vunpack.c.l.b16 %v116
    %v432 = vunpack.c.h.b16 %v116
    %v433 = vunpack.c.l.b16 %v117
    %v434 = vunpack.c.h.b16 %v117
    %v435 = vunpack.c.l.b16 %v118
    %v436 = vunpack.c.h.b16 %v118
    %v437 = vunpack.c.l.b16 %v119
    %v438 = vunpack.c.h.b16 %v119
    %v439 = vunpack.c.l.b16 %v120
    %v440 = vunpack.c.h.b16 %v120
    %v441 = vunpack.c.l.b16 %v121
    %v442 = vunpack.c.h.b16 %v121
    %v443 = vunpack.c.l.b16 %v122
    %v444 = vunpack.c.h.b16 %v122
    %v445 = vunpack.c.l.b16 %v123
    %v446 = vunpack.c.h.b16 %v123
    %v447 = vunpack.c.l.b16 %v124
    %v448 = vunpack.c.h.b16 %v124
    %v449 = vunpack.c.l.b16 %v125
    %v450 = vunpack.c.h.b16 %v125
    %v451 = vunpack.c.l.b16 %v126
    %v452 = vunpack.c.h.b16 %v126
    %v453 = vunpack.c.l.b16 %v127
    %v454 = vunpack.c.h.b16 %v127
    %v455 = vunpack.c.l.b16 %v128
    %v456 = vunpack.c.h.b16 %v128
    %v457 = vunpack.c.l.b16 %v129
    %v458 = vunpack.c.h.b16 %v129
    %v459 = vunpack.c.l.b16 %v130
    %v460 = vunpack.c.h.b16 %v130
    %v461 = vunpack.c.l.b16 %v131
    %v462 = vunpack.c.h.b16 %v131
    %v463 = vunpack.c.l.b16 %v132
    %v464 = vunpack.c.h.b16 %v132
    %v465 = vunpack.c.l.b16 %v133
    %v466 = vunpack.c.h.b16 %v133
    %v467 = vunpack.c.l.b16 %v134
    %v468 = vunpack.c.h.b16 %v134
    %v469 = vunpack.c.l.b16 %v135
    %v470 = vunpack.c.h.b16 %v135
    %v471 = vunpack.c.l.b16 %v136
    %v472 = vunpack.c.h.b16 %v136
    %v473 = vunpack.c.l.b16 %v137
    %v474 = vunpack.c.h.b16 %v137
    %v475 = vunpack.c.l.b16 %v138
    %v476 = vunpack.c.h.b16 %v138
    %v477 = vunpack.c.l.b16 %v139
    %v478 = vunpack.c.h.b16 %v139
    %v479 = vunpack.c.l.b16 %v140
    %v480 = vunpack.c.h.b16 %v140
    %v481 = vunpack.c.l.b16 %v141
    %v482 = vunpack.c.h.b16 %v141
    %v483 = vunpack.c.l.b16 %v142
    %v484 = vunpack.c.h.b16 %v142
    %v485 = vunpack.c.l.b16 %v143
    %v486 = vunpack.c.h.b16 %v143
    %v487 = vunpack.c.l.b16 %v144
    %v488 = vunpack.c.h.b16 %v144
    %v489 = vunpack.c.l.b16 %v145
    %v490 = vunpack.c.h.b16 %v145
    %v491 = vunpack.c.l.b16 %v146
    %v492 = vunpack.c.h.b16 %v146
    %v493 = vunpack.c.l.b16 %v147
    %v494 = vunpack.c.h.b16 %v147
    %v495 = vunpack.c.l.b16 %v148
    %v496 = vunpack.c.h.b16 %v148
    %v497 = vunpack.c.l.b16 %v149
    %v498 = vunpack.c.h.b16 %v149
    %v499 = vunpack.c.l.b16 %v150
    %v500 = vunpack.c.h.b16 %v150
    %v501 = vunpack.c.l.b16 %v151
    %v502 = vunpack.c.h.b16 %v151
    %v503 = vunpack.c.l.b16 %v152
    %v504 = vunpack.c.h.b16 %v152
    %v505 = vunpack.c.l.b16 %v153
    %v506 = vunpack.c.h.b16 %v153
    %v507 = vunpack.c.l.b16 %v154
    %v508 = vunpack.c.h.b16 %v154
    %v509 = vunpack.c.l.b16 %v155
    %v510 = vunpack.c.h.b16 %v155
    %v511 = vunpack.c.l.b16 %v156
    %v512 = vunpack.c.h.b16 %v156
    %v513 = vunpack.c.l.b16 %v157
    %v514 = vunpack.c.h.b16 %v157
    %v515 = vunpack.c.l.b16 %v158
    %v516 = vunpack.c.h.b16 %v158
    %v517 = vunpack.c.l.b16 %v159
    %v518 = vunpack.c.h.b16 %v159
    %v519 = vunpack.c.l.b16 %v160
    %v520 = vunpack.c.h.b16 %v160
    %v521 = vunpack.c.l.b16 %v161
    %v522 = vunpack.c.h.b16 %v161
    %v523 = vunpack.c.l.b16 %v162
    %v524 = vunpack.c.h.b16 %v162
    %v525 = vunpack.c.l.b16 %v163
    %v526 = vunpack.c.h.b16 %v163
    %v527 = vunpack.c.l.b16 %v164
    %v528 = vunpack.c.h.b16 %v164
    %v529 = vunpack.c.l.b16 %v165
    %v530 = vunpack.c.h.b16 %v165
    %v531 = vunpack.c.l.b16 %v166
    %v532 = vunpack.c.h.b16 %v166
    %v533 = vunpack.c.l.b16 %v167
    %v534 = vunpack.c.h.b16 %v167
    %v535 = vunpack.c.l.b16 %v168
    %v536 = vunpack.c.h.b16 %v168
    %v537 = vunpack.c.l.b16 %v169
    %v538 = vunpack.c.h.b16 %v169
    %v539 = vunpack.c.l.b16 %v170
    %v540 = vunpack.c.h.b16 %v170
    %v541 = vunpack.c.l.b16 %v171
    %v542 = vunpack.c.h.b16 %v171
    %v543 = vunpack.c.l.b16 %v172
    %v544 = vunpack.c.h.b16 %v172
    %v545 = vunpack.c.l.b16 %v173
    %v546 = vunpack.c.h.b16 %v173
    %v547 = vunpack.c.l.b16 %v174
    %v548 = vunpack.c.h.b16 %v174
    %v549 = vunpack.c.l.b16 %v175
    %v550 = vunpack.c.h.b16 %v175
    %v551 = vunpack.c.l.b16 %v176
    %v552 = vunpack.c.h.b16 %v176
    %v553 = vunpack.c.l.b16 %v177
    %v554 = vunpack.c.h.b16 %v177
    %v555 = vunpack.c.l.b16 %v178
    %v556 = vunpack.c.h.b16 %v178
    %v557 = vunpack.c.l.b16 %v179
    %v558 = vunpack.c.h.b16 %v179
    %v559 = vunpack.c.l.b16 %v180
    %v560 = vunpack.c.h.b16 %v180
    %v561 = vunpack.c.l.b16 %v181
    %v562 = vunpack.c.h.b16 %v181
    %v563 = vunpack.c.l.b16 %v182
    %v564 = vunpack.c.h.b16 %v182
    %v565 = vunpack.c.l.b16 %v183
    %v566 = vunpack.c.h.b16 %v183
    %v567 = vunpack.c.l.b16 %v184
    %v568 = vunpack.c.h.b16 %v184
    %v569 = vpack.c.b16 %v321, %v313
    %v570 = vpack.c.b16 %v322, %v314
    %v571 = vpack.c.b16 %v323, %v315
    %v572 = vpack.c.b16 %v324, %v316
    %v573 = vpack.c.b16 %v325, %v317
    %v574 = vpack.c.b16 %v326, %v318
    %v575 = vpack.c.b16 %v327, %v319
    %v576 = vpack.c.b16 %v328, %v320
    %v577 = vpack.c.b16 %v337, %v329
    %v578 = vpack.c.b16 %v338, %v330
    %v579 = vpack.c.b16 %v339, %v331
    %v580 = vpack.c.b16 %v340, %v332
    %v581 = vpack.c.b16 %v341, %v333
    %v582 = vpack.c.b16 %v342, %v334
    %v583 = vpack.c.b16 %v343, %v335
    %v584 = vpack.c.b16 %v344, %v336
    %v585 = vpack.c.b16 %v353, %v345
    %v586 = vpack.c.b16 %v354, %v346
    %v587 = vpack.c.b16 %v355, %v347
    %v588 = vpack.c.b16 %v356, %v348
    %v589 = vpack.c.b16 %v357, %v349
    %v590 = vpack.c.b16 %v358, %v350
    %v591 = vpack.c.b16 %v359, %v351
    %v592 = vpack.c.b16 %v360, %v352
    %v593 = vpack.c.b16 %v369, %v361
    %v594 = vpack.c.b16 %v370, %v362
    %v595 = vpack.c.b16 %v371, %v363
    %v596 = vpack.c.b16 %v372, %v364
    %v597 = vpack.c.b16 %v373, %v365
    %v598 = vpack.c.b16 %v374, %v366
    %v599 = vpack.c.b16 %v375, %v367
    %v600 = vpack.c.b16 %v376, %v368
    %v601 = vpack.c.b16 %v385, %v377
    %v602 = vpack.c.b16 %v386, %v378
    %v603 = vpack.c.b16 %v387, %v379
    %v604 = vpack.c.b16 %v388, %v380
    %v605 = vpack.c.b16 %v389, %v381
    %v606 = vpack.c.b16 %v390, %v382
    %v607 = vpack.c.b16 %v391, %v383
    %v608 = vpack.c.b16 %v392, %v384
    %v609 = vpack.c.b16 %v401, %v393
    %v610 = vpack.c.b16 %v402, %v394
    %v611 = vpack.c.b16 %v403, %v395
    %v612 = vpack.c.b16 %v404, %v396
    %v613 = vpack.c.b16 %v405, %v397
    %v614 = vpack.c.b16 %v406, %v398
    %v615 = vpack.c.b16 %v407, %v399
    %v616 = vpack.c.b16 %v408, %v400
    %v617 = vpack.c.b16 %v417, %v409
    %v618 = vpack.c.b16 %v418, %v410
    %v619 = vpack.c.b16 %v419, %v411
    %v620 = vpack.c.b16 %v420, %v412
    %v621 = vpack.c.b16 %v421, %v413
    %v622 = vpack.c.b16 %v422, %v414
    %v623 = vpack.c.b16 %v423, %v415
    %v624 = vpack.c.b16 %v424, %v416
    %v625 = vpack.c.b16 %v433, %v425
    %v626 = vpack.c.b16 %v434, %v426
    %v627 = vpack.c.b16 %v435, %v427
    %v628 = vpack.c.b16 %v436, %v428
    %v629 = vpack.c.b16 %v437, %v429
    %v630 = vpack.c.b16 %v438, %v430
    %v631 = vpack.c.b16 %v439, %v431
    %v632 = vpack.c.b16 %v440, %v432
    %v633 = vpack.c.b16 %v449, %v441
    %v634 = vpack.c.b16 %v450, %v442
    %v635 = vpack.c.b16 %v451, %v443
    %v636 = vpack.c.b16 %v452, %v444
    %v637 = vpack.c.b16 %v453, %v445
    %v638 = vpack.c.b16 %v454, %v446
    %v639 = vpack.c.b16 %v455, %v447
    %v640 = vpack.c.b16 %v456, %v448
    %v641 = vpack.c.b16 %v465, %v457
    %v642 = vpack.c.b16 %v466, %v458
    %v643 = vpack.c.b16 %v467, %v459
    %v644 = vpack.c.b16 %v468, %v460
    %v645 = vpack.c.b16 %v469, %v461
    %v646 = vpack.c.b16 %v470, %v462
    %v647 = vpack.c.b16 %v471, %v463
    %v648 = vpack.c.b16 %v472, %v464
    %v649 = vpack.c.b16 %v481, %v473
    %v650 = vpack.c.b16 %v482, %v474
    %v651 = vpack.c.b16 %v483, %v475
    %v652 = vpack.c.b16 %v484, %v476
    %v653 = vpack.c.b16 %v485, %v477
    %v654 = vpack.c.b16 %v486, %v478
    %v655 = vpack.c.b16 %v487, %v479
    %v656 = vpack.c.b16 %v488, %v480
    %v657 = vpack.c.b16 %v497, %v489
    %v658 = vpack.c.b16 %v498, %v490
    %v659 = vpack.c.b16 %v499, %v491
    %v660 = vpack.c.b16 %v500, %v492
    %v661 = vpack.c.b16 %v501, %v493
    %v662 = vpack.c.b16 %v502, %v494
    %v663 = vpack.c.b16 %v503, %v495
    %v664 = vpack.c.b16 %v504, %v496
    %v665 = vpack.c.b16 %v513, %v505
    %v666 = vpack.c.b16 %v514, %v506
    %v667 = vpack.c.b16 %v515, %v507
    %v668 = vpack.c.b16 %v516, %v508
    %v669 = vpack.c.b16 %v517, %v509
    %v670 = vpack.c.b16 %v518, %v510
    %v671 = vpack.c.b16 %v519, %v511
    %v672 = vpack.c.b16 %v520, %v512
    %v673 = vpack.c.b16 %v529, %v521
    %v674 = vpack.c.b16 %v530, %v522
    %v675 = vpack.c.b16 %v531, %v523
    %v676 = vpack.c.b16 %v532, %v524
    %v677 = vpack.c.b16 %v533, %v525
    %v678 = vpack.c.b16 %v534, %v526
    %v679 = vpack.c.b16 %v535, %v527
    %v680 = vpack.c.b16 %v536, %v528
    %v681 = vpack.c.b16 %v545, %v537
    %v682 = vpack.c.b16 %v546, %v538
    %v683 = vpack.c.b16 %v547, %v539
    %v684 = vpack.c.b16 %v548, %v540
    %v685 = vpack.c.b16 %v549, %v541
    %v686 = vpack.c.b16 %v550, %v542
    %v687 = vpack.c.b16 %v551, %v543
    %v688 = vpack.c.b16 %v552, %v544
    %v689 = vpack.c.b16 %v561, %v553
    %v690 = vpack.c.b16 %v562, %v554
    %v691 = vpack.c.b16 %v563, %v555
    %v692 = vpack.c.b16 %v564, %v556
    %v693 = vpack.c.b16 %v565, %v557
    %v694 = vpack.c.b16 %v566, %v558
    %v695 = vpack.c.b16 %v567, %v559
    %v696 = vpack.c.b16 %v568, %v560
    %825 = vmatprep.subr.bf16.mxu0 %v626
    %826 = vmatpush1.bf16.msra.mxu0 %v625
    %827 = vmatprep.subr.bf16.mxu0 %v618
    %828 = vmatpush1.bf16.msra.mxu0 %v617
    %829 = vmatprep.subr.bf16.mxu0 %v610
    %830 = vmatpush1.bf16.msra.mxu0 %v609
    %831 = vmatprep.subr.bf16.mxu0 %v602
    %832 = vmatpush1.bf16.msra.mxu0 %v601
    %833 = vmatprep.subr.bf16.mxu0 %v594
    %834 = vmatpush1.bf16.msra.mxu0 %v593
    %835 = vmatprep.subr.bf16.mxu0 %v586
    %836 = vmatpush1.bf16.msra.mxu0 %v585
    %837 = vmatprep.subr.bf16.mxu0 %v578
    %838 = vmatpush1.bf16.msra.mxu0 %v577
    %839 = vmatprep.subr.bf16.mxu0 %v570
    %840 = vmatpush1.bf16.msra.mxu0 %v569
    %841 = vmatprep.subr.bf16.mxu0 %v690
    %842 = vmatpush2.bf16.msra.mxu0 %v689
    %843 = vmatprep.subr.bf16.mxu0 %v682
    %844 = vmatpush2.bf16.msra.mxu0 %v681
    %845 = vmatprep.subr.bf16.mxu0 %v674
    %846 = vmatpush2.bf16.msra.mxu0 %v673
    %847 = vmatprep.subr.bf16.mxu0 %v666
    %848 = vmatpush2.bf16.msra.mxu0 %v665
    %849 = vmatprep.subr.bf16.mxu0 %v658
    %850 = vmatpush2.bf16.msra.mxu0 %v657
    %851 = vmatprep.subr.bf16.mxu0 %v650
    %852 = vmatpush2.bf16.msra.mxu0 %v649
    %853 = vmatprep.subr.bf16.mxu0 %v642
    %854 = vmatpush2.bf16.msra.mxu0 %v641
    %855 = vmatprep.subr.bf16.mxu0 %v634
    %856 = vmatpush2.bf16.msra.mxu0 %v633
    %857 = vmatprep.mubr.bf16.mxu0 %v56
    %858 = vmatmul.mubr.bf16.gmra.mxu0 %v55
    %v859 = vpop.f32.mrf.mxu0
    %v860 = vadd.f32 0.0, %v859
    %v861 = vpop.f32.mrf.mxu0
    %v862 = vadd.f32 0.0, %v861
    %v863 = vpop.f32.mrf.mxu0
    %v864 = vpop.f32.mrf.mxu0
    %865 = vdwg.mxu0
    %866 = vmatprep.subr.bf16.mxu0 %v628
    %867 = vmatpush1.bf16.msra.mxu0 %v627
    %868 = vmatprep.subr.bf16.mxu0 %v620
    %869 = vmatpush1.bf16.msra.mxu0 %v619
    %870 = vmatprep.subr.bf16.mxu0 %v612
    %871 = vmatpush1.bf16.msra.mxu0 %v611
    %872 = vmatprep.subr.bf16.mxu0 %v604
    %873 = vmatpush1.bf16.msra.mxu0 %v603
    %874 = vmatprep.subr.bf16.mxu0 %v596
    %875 = vmatpush1.bf16.msra.mxu0 %v595
    %876 = vmatprep.subr.bf16.mxu0 %v588
    %877 = vmatpush1.bf16.msra.mxu0 %v587
    %878 = vmatprep.subr.bf16.mxu0 %v580
    %879 = vmatpush1.bf16.msra.mxu0 %v579
    %880 = vmatprep.subr.bf16.mxu0 %v572
    %881 = vmatpush1.bf16.msra.mxu0 %v571
    %882 = vmatprep.subr.bf16.mxu0 %v692
    %883 = vmatpush2.bf16.msra.mxu0 %v691
    %884 = vmatprep.subr.bf16.mxu0 %v684
    %885 = vmatpush2.bf16.msra.mxu0 %v683
    %886 = vmatprep.subr.bf16.mxu0 %v676
    %887 = vmatpush2.bf16.msra.mxu0 %v675
    %888 = vmatprep.subr.bf16.mxu0 %v668
    %889 = vmatpush2.bf16.msra.mxu0 %v667
    %890 = vmatprep.subr.bf16.mxu0 %v660
    %891 = vmatpush2.bf16.msra.mxu0 %v659
    %892 = vmatprep.subr.bf16.mxu0 %v652
    %893 = vmatpush2.bf16.msra.mxu0 %v651
    %894 = vmatprep.subr.bf16.mxu0 %v644
    %895 = vmatpush2.bf16.msra.mxu0 %v643
    %896 = vmatprep.subr.bf16.mxu0 %v636
    %897 = vmatpush2.bf16.msra.mxu0 %v635
    %898 = vmatprep.mubr.bf16.mxu0 %v56
    %899 = vmatmul.mubr.bf16.gmra.mxu0 %v55
    %v900 = vpop.f32.mrf.mxu0
    %v901 = vadd.f32 0.0, %v900
    %v902 = vpop.f32.mrf.mxu0
    %v903 = vadd.f32 0.0, %v902
    %v904 = vpop.f32.mrf.mxu0
    %v905 = vpop.f32.mrf.mxu0
    %906 = vdwg.mxu0
    %907 = vmatprep.subr.bf16.mxu0 %v630
    %908 = vmatpush1.bf16.msra.mxu0 %v629
    %909 = vmatprep.subr.bf16.mxu0 %v622
    %910 = vmatpush1.bf16.msra.mxu0 %v621
    %911 = vmatprep.subr.bf16.mxu0 %v614
    %912 = vmatpush1.bf16.msra.mxu0 %v613
    %913 = vmatprep.subr.bf16.mxu0 %v606
    %914 = vmatpush1.bf16.msra.mxu0 %v605
    %915 = vmatprep.subr.bf16.mxu0 %v598
    %916 = vmatpush1.bf16.msra.mxu0 %v597
    %917 = vmatprep.subr.bf16.mxu0 %v590
    %918 = vmatpush1.bf16.msra.mxu0 %v589
    %919 = vmatprep.subr.bf16.mxu0 %v582
    %920 = vmatpush1.bf16.msra.mxu0 %v581
    %921 = vmatprep.subr.bf16.mxu0 %v574
    %922 = vmatpush1.bf16.msra.mxu0 %v573
    %923 = vmatprep.subr.bf16.mxu0 %v694
    %924 = vmatpush2.bf16.msra.mxu0 %v693
    %925 = vmatprep.subr.bf16.mxu0 %v686
    %926 = vmatpush2.bf16.msra.mxu0 %v685
    %927 = vmatprep.subr.bf16.mxu0 %v678
    %928 = vmatpush2.bf16.msra.mxu0 %v677
    %929 = vmatprep.subr.bf16.mxu0 %v670
    %930 = vmatpush2.bf16.msra.mxu0 %v669
    %931 = vmatprep.subr.bf16.mxu0 %v662
    %932 = vmatpush2.bf16.msra.mxu0 %v661
    %933 = vmatprep.subr.bf16.mxu0 %v654
    %934 = vmatpush2.bf16.msra.mxu0 %v653
    %935 = vmatprep.subr.bf16.mxu0 %v646
    %936 = vmatpush2.bf16.msra.mxu0 %v645
    %937 = vmatprep.subr.bf16.mxu0 %v638
    %938 = vmatpush2.bf16.msra.mxu0 %v637
    %939 = vmatprep.mubr.bf16.mxu0 %v56
    %940 = vmatmul.mubr.bf16.gmra.mxu0 %v55
    %v941 = vpop.f32.mrf.mxu0
    %v942 = vadd.f32 0.0, %v941
    %v943 = vpop.f32.mrf.mxu0
    %v944 = vadd.f32 0.0, %v943
    %v945 = vpop.f32.mrf.mxu0
    %v946 = vpop.f32.mrf.mxu0
    %947 = vdwg.mxu0
    %948 = vmatprep.subr.bf16.mxu0 %v632
    %949 = vmatpush1.bf16.msra.mxu0 %v631
    %950 = vmatprep.subr.bf16.mxu0 %v624
    %951 = vmatpush1.bf16.msra.mxu0 %v623
    %952 = vmatprep.subr.bf16.mxu0 %v616
    %953 = vmatpush1.bf16.msra.mxu0 %v615
    %954 = vmatprep.subr.bf16.mxu0 %v608
    %955 = vmatpush1.bf16.msra.mxu0 %v607
    %956 = vmatprep.subr.bf16.mxu0 %v600
    %957 = vmatpush1.bf16.msra.mxu0 %v599
    %958 = vmatprep.subr.bf16.mxu0 %v592
    %959 = vmatpush1.bf16.msra.mxu0 %v591
    %960 = vmatprep.subr.bf16.mxu0 %v584
    %961 = vmatpush1.bf16.msra.mxu0 %v583
    %962 = vmatprep.subr.bf16.mxu0 %v576
    %963 = vmatpush1.bf16.msra.mxu0 %v575
    %964 = vmatprep.subr.bf16.mxu0 %v696
    %965 = vmatpush2.bf16.msra.mxu0 %v695
    %966 = vmatprep.subr.bf16.mxu0 %v688
    %967 = vmatpush2.bf16.msra.mxu0 %v687
    %968 = vmatprep.subr.bf16.mxu0 %v680
    %969 = vmatpush2.bf16.msra.mxu0 %v679
    %970 = vmatprep.subr.bf16.mxu0 %v672
    %971 = vmatpush2.bf16.msra.mxu0 %v671
    %972 = vmatprep.subr.bf16.mxu0 %v664
    %973 = vmatpush2.bf16.msra.mxu0 %v663
    %974 = vmatprep.subr.bf16.mxu0 %v656
    %975 = vmatpush2.bf16.msra.mxu0 %v655
    %976 = vmatprep.subr.bf16.mxu0 %v648
    %977 = vmatpush2.bf16.msra.mxu0 %v647
    %978 = vmatprep.subr.bf16.mxu0 %v640
    %979 = vmatpush2.bf16.msra.mxu0 %v639
    %980 = vmatprep.mubr.bf16.mxu0 %v56
    %981 = vmatmul.mubr.bf16.gmra.mxu0 %v55
    %v982 = vpop.f32.mrf.mxu0
    %v983 = vadd.f32 0.0, %v982
    %v984 = vpop.f32.mrf.mxu0
    %v985 = vadd.f32 0.0, %v984
    %v986 = vpop.f32.mrf.mxu0
    %v987 = vpop.f32.mrf.mxu0
    %988 = vdwg.mxu0
    %v989 = vcvt.f32.s32.to.zero.pseudo %v860
    %v990 = vcvt.f32.s32.to.zero.pseudo %v862
    %v991 = vcvt.f32.s32.to.zero.pseudo %v901
    %v992 = vcvt.f32.s32.to.zero.pseudo %v903
    %v993 = vcvt.f32.s32.to.zero.pseudo %v942
    %v994 = vcvt.f32.s32.to.zero.pseudo %v944
    %v995 = vcvt.f32.s32.to.zero.pseudo %v983
    %v996 = vcvt.f32.s32.to.zero.pseudo %v985
    %v997 = vand.u32 %v989, 1
    %v998 = vand.u32 %v990, 1
    %v999 = vand.u32 %v991, 1
    %v1000 = vand.u32 %v992, 1
    %v1001 = vand.u32 %v993, 1
    %v1002 = vand.u32 %v994, 1
    %v1003 = vand.u32 %v995, 1
    %v1004 = vand.u32 %v996, 1
    %v1005 = vcvt.s32.f32 %v997
    %v1006 = vcvt.s32.f32 %v998
    %v1007 = vcvt.s32.f32 %v999
    %v1008 = vcvt.s32.f32 %v1000
    %v1009 = vcvt.s32.f32 %v1001
    %v1010 = vcvt.s32.f32 %v1002
    %v1011 = vcvt.s32.f32 %v1003
    %v1012 = vcvt.s32.f32 %v1004
    %v1021 = vcombine.low %v1005, %v1006
    %v1022 = vcombine.low %v1007, %v1008
    %v1024 = vunpack.c.l.s4 1983009808
    %v1025 = vunpack.c.0.s8 %v1024
    %v1026 = vlaneseq
    %v1027 = vshrl.u32 %v1026, 7
    %v1028 = vsub.s32 %v1025, %v1027
    %v1029 = vrot.slane %v1021, %v1028
    %v1031 = vunpack.c.l.s4 1983009808
    %v1032 = vunpack.c.0.s8 %v1031
    %v1033 = vlaneseq
    %v1034 = vshrl.u32 %v1033, 7
    %v1035 = vsub.s32 %v1032, %v1034
    %v1036 = vrot.slane %v1022, %v1035
    %v1037 = vcombine.low %v1029, %v1036
    %v1038 = vcombine.low %v1009, %v1010
    %v1039 = vcombine.low %v1011, %v1012
    %v1041 = vunpack.c.l.s4 1983009808
    %v1042 = vunpack.c.0.s8 %v1041
    %v1043 = vlaneseq
    %v1044 = vshrl.u32 %v1043, 7
    %v1045 = vsub.s32 %v1042, %v1044
    %v1046 = vrot.slane %v1038, %v1045
    %v1048 = vunpack.c.l.s4 1983009808
    %v1049 = vunpack.c.0.s8 %v1048
    %v1050 = vlaneseq
    %v1051 = vshrl.u32 %v1050, 7
    %v1052 = vsub.s32 %v1049, %v1051
    %v1053 = vrot.slane %v1039, %v1052
    %v1054 = vcombine.low %v1046, %v1053
    %1057 = vst [vmem:[#allocation7] sm:$0xff] %v1037
    %1058 = vst [vmem:[#allocation7 + $0x8] sm:$0xff] %v1054
    // Predicated region
    $region18: #{tpu_custom_call.1} parent=1 // pred_check
      _
    $region19: #{tpu_custom_call.1} parent=1 // pred_check_branch
      %1060 = sbr.rel (0) target = $region21
    $region20: #{tpu_custom_call.1} parent=1 // pred_region
      %s1062 = ssub.s32 256, 256
      %1063 = vsyncadd [#allocation4], %s1062
      %s1065 = sshll.u32 [#allocation7], 4
      %s1066 = int_to_ptr.vmem [resolvable:$true] %s1065
      %1068 = dma.vmem_to_hbm [thread:$0]  %s1066, 256, %s2, [#allocation4]
    $region21: #{tpu_custom_call.1} parent=1 // pred_fallthru
      _
    // Predicated region
    $region22: #{tpu_custom_call.1} parent=1 // pred_check
      _
    $region23: #{tpu_custom_call.1} parent=1 // pred_check_branch
      %1070 = sbr.rel (0) target = $region25
    $region24: #{tpu_custom_call.1} parent=1 // pred_region
      %1071 = dma.done [#allocation4], 256
    $region25: #{tpu_custom_call.1} parent=1 // pred_fallthru
      _
    %1072 = vsyncpa [#allocation3], 1
    %1073 = vsyncpa [#allocation6], 1
    %1074 = vsyncpa [#allocation4], 1

</llo_original>
